<compile_context>
chip_gen: v7x
topology: tpu7x:2x2x1
jax: 0.10.0
libtpu: 0.0.40
codegen_flags: <defaults>
</compile_context>

<pallas_src>
import math

import jax
import jax.numpy as jnp
from jax.experimental import pallas as pl
from jax.experimental.pallas import tpu as pltpu


def _round_up(n, m):
    return ((n + m - 1) // m) * m


# ----------------------------------------------------------------------------
# Fused kernel:
#   feat   = mean_p(patches[p, b, :]) @ W_pe + b_pe          (backbone stand-in)
#   logits = sigma * normalize(feat) @ normalize(W_fc).T     (EaseCosineLinear)
# ----------------------------------------------------------------------------
def _ease_forward_kernel(patches_ref, w_pe_ref, b_pe_ref, w_fc_ref, sigma_ref,
                         feat_ref, logits_ref):
    eps = jnp.float32(1e-12)

    # Mean-pool over the leading patch axis in f32 (cheap vreg adds), then
    # project once.  Pooling before the linear projection == projecting every
    # patch and averaging, matching the original mean-of-embeddings semantics.
    p_count = patches_ref.shape[0]
    pooled = jnp.sum(patches_ref[...].astype(jnp.float32), axis=0)
    pooled = pooled * jnp.float32(1.0 / p_count)                 # [TB, Dp]

    feat = jnp.dot(pooled.astype(jnp.bfloat16), w_pe_ref[...],
                   preferred_element_type=jnp.float32)           # [TB, D]
    feat = feat + b_pe_ref[...]
    feat_ref[...] = feat

    # EaseCosineLinear.  rsqrt(max(sum_sq, eps^2)) == 1 / max(||.||_2, eps),
    # matching torch F.normalize; rsqrt lands on the EUP slot (no divides).
    w = w_fc_ref[...].astype(jnp.float32)                        # [C, D]
    inv_x = jax.lax.rsqrt(
        jnp.maximum(jnp.sum(feat * feat, axis=-1, keepdims=True), eps * eps))
    inv_w = jax.lax.rsqrt(
        jnp.maximum(jnp.sum(w * w, axis=-1, keepdims=True), eps * eps))
    # Fold sigma into the x normalization: removes the extra [TB, C] VPU pass.
    x_n = (feat * (sigma_ref[0] * inv_x)).astype(jnp.bfloat16)
    w_n = (w * inv_w).astype(jnp.bfloat16)
    # Contract last dims of both operands (== x_n @ w_n.T, no explicit T, so
    # no XLU transpose is emitted).
    logits_ref[...] = jax.lax.dot_general(
        x_n, w_n, (((1,), (1,)), ((), ())),
        preferred_element_type=jnp.float32)                      # [TB, C]


def ease_forward(patches, w_pe, b_pe, w_fc, sigma):
    """patches: [P, B_pad, Dp_pad] bf16.
    Returns (feats [B_pad, D_pad] f32, logits [B_pad, C_pad] f32)."""
    p, b_pad, dp_pad = patches.shape
    d_pad = w_pe.shape[1]
    c_pad = w_fc.shape[0]
    tb = math.gcd(b_pad, 128)           # sublane-aligned batch-row tile
    grid = (b_pad // tb,)
    # TODO(synk): at real ViT sizes (Dp ~ 768*k, B*P in the thousands) also tile
    # the K dim with a VMEM accumulator and set vmem_limit_bytes explicitly
    # (mandatory on v7x with 64 MiB physical VMEM).
    return pl.pallas_call(
        _ease_forward_kernel,
        out_shape=(jax.ShapeDtypeStruct((b_pad, d_pad), jnp.float32),
                   jax.ShapeDtypeStruct((b_pad, c_pad), jnp.float32)),
        grid=grid,
        in_specs=[
            pl.BlockSpec((p, tb, dp_pad), lambda i: (0, i, 0)),    # patches
            pl.BlockSpec((dp_pad, d_pad), lambda i: (0, 0)),       # W_pe (bf16)
            pl.BlockSpec((1, d_pad), lambda i: (0, 0)),            # b_pe
            pl.BlockSpec((c_pad, d_pad), lambda i: (0, 0)),        # W_fc
            pl.BlockSpec(memory_space=pltpu.MemorySpace.SMEM),     # sigma (1,)
        ],
        out_specs=(pl.BlockSpec((tb, d_pad), lambda i: (i, 0)),
                   pl.BlockSpec((tb, c_pad), lambda i: (i, 0))),
        compiler_params=pltpu.CompilerParams(
            dimension_semantics=("parallel",)),
    )(patches, w_pe, b_pe, w_fc, sigma)


# ----------------------------------------------------------------------------
# EaseNet (forward-pass subset) with deterministic in-script parameters.
# ----------------------------------------------------------------------------
class EaseNetPallas:
    def __init__(self, key, *, in_chans=4, img_size=16, patch=8, out_dim=64,
                 init_cls=10, increment=10, use_init_ptm=True,
                 alpha=0.1, beta=0.1):
        self.patch = patch
        self.out_dim = out_dim
        self.init_cls = init_cls
        self.inc = increment
        self.use_init_ptm = use_init_ptm
        self.alpha = alpha
        self.beta = beta
        self._cur_task = 0  # state after the first update_fc()

        k_pe, k_fc = jax.random.split(key, 2)
        patch_dim = in_chans * patch * patch
        num_patches = (img_size // patch) ** 2
        self.patch_dim = patch_dim
        self.num_patches = num_patches

        # 128-lane padded internal dims (wrappers slice back to logical dims).
        self.d_pad = _round_up(out_dim, 128)
        self.c_pad = _round_up(init_cls, 128)
        self.dp_pad = _round_up(patch_dim, 128)

        # backbone patch-embedding params (pretrained-ViT stand-in)
        # TODO(synk): the 12 pretrained ViT-EASE transformer blocks + adapters
        # (timm vit_base_patch16_224_ease) are external pretrained weights with
        # no in-script definition; backbone here is patch-embed + mean pool.
        w_pe = 0.02 * jax.random.normal(k_pe, (patch_dim, out_dim), jnp.float32)
        self.w_pe = (jnp.zeros((self.dp_pad, self.d_pad), jnp.bfloat16)
                     .at[:patch_dim, :out_dim].set(w_pe.astype(jnp.bfloat16)))
        self.b_pe = jnp.zeros((1, self.d_pad), jnp.float32)

        # proxy_fc = EaseCosineLinear(out_dim, init_cls):
        #   weight ~ U(-stdv, stdv), stdv = 1/sqrt(in_features); sigma = 1.0
        # padded rows are zero -> normalize to 0 via the eps clamp -> 0 logits,
        # sliced away in forward().
        stdv = 1.0 / math.sqrt(out_dim)
        proxy_w = jax.random.uniform(
            k_fc, (init_cls, out_dim), jnp.float32, -stdv, stdv)
        self.proxy_w = (jnp.zeros((self.c_pad, self.d_pad), jnp.float32)
                        .at[:init_cls, :out_dim].set(proxy_w))
        self.proxy_sigma = jnp.ones((1,), jnp.float32)

    def _extract_patches(self, x):
        # x: [B, C, H, W] -> [P, B, C*p*p]  (non-overlapping p x p patches,
        # patch axis leading so the in-kernel mean is a plain leading-axis add).
        # TODO(synk): at real ViT sizes fold this transpose into the DMA layout
        # (NHWC storage upstream / gridded index_map) instead of materializing it.
        B, C, H, W = x.shape
        p = self.patch
        x = x.reshape(B, C, H // p, p, W // p, p)
        x = x.transpose(2, 4, 0, 1, 3, 5)            # [H/p, W/p, B, C, p, p]
        return x.reshape((H // p) * (W // p), B, C * p * p)

    def forward(self, x, test=False):
        B = x.shape[0]
        patches = self._extract_patches(x)           # [P, B, Dp] f32
        b_pad = _round_up(B, 8)
        patches_p = (jnp.zeros((self.num_patches, b_pad, self.dp_pad),
                               jnp.bfloat16)
                     .at[:, :B, :self.patch_dim]
                     .set(patches.astype(jnp.bfloat16)))

        feats_p, logits_p = ease_forward(
            patches_p, self.w_pe, self.b_pe, self.proxy_w, self.proxy_sigma)

        feats = feats_p[:B, :self.out_dim]
        if not test:
            logits = logits_p[:B, :self.init_cls]
        else:
            # TODO(synk): test-time path (concatenated multi-adapter features +
            # fc / fc.forward_reweight re-weighting) needs the per-task adapter
            # feature stack from the pretrained backbone; not replicated here.
            logits = logits_p[:B, :self.init_cls]
        return {"logits": logits, "features": feats}


def _reference_forward(net, x):
    # Pure-JAX reference with the same bf16 operand rounding as the kernel.
    patches = net._extract_patches(x)
    patches = patches.astype(jnp.bfloat16).astype(jnp.float32)   # [P, B, Dp]
    pooled = jnp.mean(patches, axis=0)
    pooled = pooled.astype(jnp.bfloat16).astype(jnp.float32)
    w_pe = net.w_pe[:net.patch_dim, :net.out_dim].astype(jnp.float32)
    feat = pooled @ w_pe + net.b_pe[:, :net.out_dim]

    eps = 1e-12
    w = net.proxy_w[:net.init_cls, :net.out_dim]
    x_n = feat / jnp.maximum(
        jnp.sqrt(jnp.sum(feat * feat, axis=-1, keepdims=True)), eps)
    w_n = w / jnp.maximum(
        jnp.sqrt(jnp.sum(w * w, axis=-1, keepdims=True)), eps)
    x_n = x_n.astype(jnp.bfloat16).astype(jnp.float32)
    w_n = w_n.astype(jnp.bfloat16).astype(jnp.float32)
    logits = net.proxy_sigma[0] * (x_n @ w_n.T)
    return feat, logits


if __name__ == "__main__":
    key = jax.random.PRNGKey(0)
    k_model, k_x = jax.random.split(key)

    net = EaseNetPallas(k_model, in_chans=4, img_size=16, patch=8,
                        out_dim=64, init_cls=10, increment=10)

    x = jax.random.normal(k_x, (2, 4, 16, 16), jnp.float32)  # NCHW
    out = net.forward(x, test=False)
    jax.block_until_ready(out["logits"])
    jax.block_until_ready(out["features"])

    assert out["logits"].shape == (2, 10)
    assert out["features"].shape == (2, 64)
    assert bool(jnp.all(jnp.isfinite(out["features"])))
    # logits are sigma * cosine similarities; bf16 MXU rounding can push them
    # a few ulps past 1, so the bound is slightly loose.
    assert bool(jnp.all(jnp.abs(out["logits"]) <= 1.0 + 2e-2))

    feat_ref, logits_ref = _reference_forward(net, x)
    assert bool(jnp.allclose(out["features"], feat_ref, rtol=2e-2, atol=2e-3))
    assert bool(jnp.allclose(out["logits"], logits_ref, rtol=2e-2, atol=2e-2))

    print("KERNEL_OK")
</pallas_src>

<mosaic_0001>
module attributes {stable_mosaic.version = 11 : i64} {
  func.func @_ease_forward_kernel(%arg0: i32, %arg1: memref<4x8x256xbf16, #tpu.memory_space<vmem>>, %arg2: memref<256x128xbf16, #tpu.memory_space<vmem>>, %arg3: memref<1x128xf32, #tpu.memory_space<vmem>>, %arg4: memref<128x128xf32, #tpu.memory_space<vmem>>, %arg5: memref<1xf32, #tpu.memory_space<smem>>, %arg6: memref<8x128xf32, #tpu.memory_space<vmem>>, %arg7: memref<8x128xf32, #tpu.memory_space<vmem>>) attributes {dimension_semantics = [#tpu.dimension_semantics<parallel>], iteration_bounds = array<i64: 1>, scalar_prefetch = 0 : i64, scratch_operands = 0 : i64, tpu.core_type = #tpu.core_type<tc>, window_params = [{transform_indices = @transform_0, window_bounds = array<i64: 4, 8, 256>}, {pipeline_mode = #tpu.pipeline_mode<synchronous>, transform_indices = @transform_1, window_bounds = array<i64: 256, 128>}, {pipeline_mode = #tpu.pipeline_mode<synchronous>, transform_indices = @transform_2, window_bounds = array<i64: 1, 128>}, {pipeline_mode = #tpu.pipeline_mode<synchronous>, transform_indices = @transform_3, window_bounds = array<i64: 128, 128>}, {transform_indices = @transform_4, window_bounds = array<i64: 1>}, {transform_indices = @transform_5, window_bounds = array<i64: 8, 128>}, {transform_indices = @transform_6, window_bounds = array<i64: 8, 128>}]} {
    %c0 = arith.constant 0 : index
    %c0_0 = arith.constant 0 : index
    %c0_1 = arith.constant 0 : index
    %0 = vector.load %arg1[%c0, %c0_0, %c0_1] : memref<4x8x256xbf16, #tpu.memory_space<vmem>>, vector<4x8x256xbf16>
    %1 = arith.extf %0 : vector<4x8x256xbf16> to vector<4x8x256xf32>
    %cst = arith.constant dense<0.000000e+00> : vector<8x256xf32>
    %2 = vector.multi_reduction <add>, %1, %cst [0] : vector<4x8x256xf32> to vector<8x256xf32>
    %cst_2 = arith.constant 2.500000e-01 : f32
    %3 = vector.broadcast %cst_2 : f32 to vector<8x256xf32>
    %4 = arith.mulf %2, %3 : vector<8x256xf32>
    %5 = arith.truncf %4 : vector<8x256xf32> to vector<8x256xbf16>
    %c0_3 = arith.constant 0 : index
    %c0_4 = arith.constant 0 : index
    %6 = vector.load %arg2[%c0_3, %c0_4] : memref<256x128xbf16, #tpu.memory_space<vmem>>, vector<256x128xbf16>
    %cst_5 = arith.constant dense<0.000000e+00> : vector<8x128xf32>
    %7 = tpu.matmul %5, %6, %cst_5 {dimension_numbers = #tpu.dot_dimension_numbers<[1], [0], [0], [1], [0, 0, 1, 1], [], []>} : vector<8x256xbf16>, vector<256x128xbf16>, vector<8x128xf32> -> vector<8x128xf32>
    %c0_6 = arith.constant 0 : index
    %c0_7 = arith.constant 0 : index
    %8 = vector.load %arg3[%c0_6, %c0_7] : memref<1x128xf32, #tpu.memory_space<vmem>>, vector<1x128xf32>
    %9 = vector.broadcast %8 : vector<1x128xf32> to vector<8x128xf32>
    %10 = arith.addf %7, %9 : vector<8x128xf32>
    %c0_8 = arith.constant 0 : index
    %c0_9 = arith.constant 0 : index
    %11 = vector.load %arg6[%c0_8, %c0_9] : memref<8x128xf32, #tpu.memory_space<vmem>>, vector<8x128xf32>
    tpu.vector_store %arg6[%c0_8, %c0_9], %10 {strides = array<i32>} : memref<8x128xf32, #tpu.memory_space<vmem>>, vector<8x128xf32>,
    %c0_10 = arith.constant 0 : index
    %c0_11 = arith.constant 0 : index
    %12 = vector.load %arg4[%c0_10, %c0_11] : memref<128x128xf32, #tpu.memory_space<vmem>>, vector<128x128xf32>
    %13 = arith.mulf %10, %10 : vector<8x128xf32>
    %cst_12 = arith.constant dense<0.000000e+00> : vector<8xf32>
    %14 = vector.multi_reduction <add>, %13, %cst_12 [1] : vector<8x128xf32> to vector<8xf32>
    %15 = vector.shape_cast %14 : vector<8xf32> to vector<8x1xf32>
    %cst_13 = arith.constant 9.99999996E-13 : f32
    %cst_14 = arith.constant 9.99999996E-13 : f32
    %16 = arith.mulf %cst_13, %cst_14 : f32
    %17 = vector.broadcast %16 : f32 to vector<8x1xf32>
    %18 = arith.maximumf %15, %17 : vector<8x1xf32>
    %19 = math.rsqrt %18 : vector<8x1xf32>
    %20 = arith.mulf %12, %12 : vector<128x128xf32>
    %cst_15 = arith.constant dense<0.000000e+00> : vector<128xf32>
    %21 = vector.multi_reduction <add>, %20, %cst_15 [1] : vector<128x128xf32> to vector<128xf32>
    %22 = vector.shape_cast %21 : vector<128xf32> to vector<128x1xf32>
    %cst_16 = arith.constant 9.99999996E-13 : f32
    %cst_17 = arith.constant 9.99999996E-13 : f32
    %23 = arith.mulf %cst_16, %cst_17 : f32
    %24 = vector.broadcast %23 : f32 to vector<128x1xf32>
    %25 = arith.maximumf %22, %24 : vector<128x1xf32>
    %26 = math.rsqrt %25 : vector<128x1xf32>
    %c0_18 = arith.constant 0 : index
    %27 = memref.load %arg5[%c0_18] : memref<1xf32, #tpu.memory_space<smem>>
    %28 = vector.broadcast %27 : f32 to vector<8x1xf32>
    %29 = arith.mulf %28, %19 : vector<8x1xf32>
    %30 = vector.broadcast %29 : vector<8x1xf32> to vector<8x128xf32>
    %31 = arith.mulf %10, %30 : vector<8x128xf32>
    %32 = arith.truncf %31 : vector<8x128xf32> to vector<8x128xbf16>
    %33 = vector.broadcast %26 : vector<128x1xf32> to vector<128x128xf32>
    %34 = arith.mulf %12, %33 : vector<128x128xf32>
    %35 = arith.truncf %34 : vector<128x128xf32> to vector<128x128xbf16>
    %cst_19 = arith.constant dense<0.000000e+00> : vector<8x128xf32>
    %36 = tpu.matmul %32, %35, %cst_19 {dimension_numbers = #tpu.dot_dimension_numbers<[1], [1], [0], [0], [0, 0, 1, 0], [], []>} : vector<8x128xbf16>, vector<128x128xbf16>, vector<8x128xf32> -> vector<8x128xf32>
    %c0_20 = arith.constant 0 : index
    %c0_21 = arith.constant 0 : index
    %37 = vector.load %arg7[%c0_20, %c0_21] : memref<8x128xf32, #tpu.memory_space<vmem>>, vector<8x128xf32>
    tpu.vector_store %arg7[%c0_20, %c0_21], %36 {strides = array<i32>} : memref<8x128xf32, #tpu.memory_space<vmem>>, vector<8x128xf32>,
    return
  }
  func.func @transform_0(%arg0: i32) -> (i32, i32, i32) {
    %c0_i32 = arith.constant 0 : i32
    %c0_i32_0 = arith.constant 0 : i32
    %c0_i32_1 = arith.constant 0 : i32
    return %c0_i32, %arg0, %c0_i32_0 : i32, i32, i32
  }
  func.func @transform_1(%arg0: i32) -> (i32, i32) {
    %c0_i32 = arith.constant 0 : i32
    %c0_i32_0 = arith.constant 0 : i32
    %c0_i32_1 = arith.constant 0 : i32
    return %c0_i32, %c0_i32_0 : i32, i32
  }
  func.func @transform_2(%arg0: i32) -> (i32, i32) {
    %c0_i32 = arith.constant 0 : i32
    %c0_i32_0 = arith.constant 0 : i32
    %c0_i32_1 = arith.constant 0 : i32
    return %c0_i32, %c0_i32_0 : i32, i32
  }
  func.func @transform_3(%arg0: i32) -> (i32, i32) {
    %c0_i32 = arith.constant 0 : i32
    %c0_i32_0 = arith.constant 0 : i32
    %c0_i32_1 = arith.constant 0 : i32
    return %c0_i32, %c0_i32_0 : i32, i32
  }
  func.func @transform_4(%arg0: i32) -> i32 {
    %c0_i32 = arith.constant 0 : i32
    %c0_i32_0 = arith.constant 0 : i32
    return %c0_i32 : i32
  }
  func.func @transform_5(%arg0: i32) -> (i32, i32) {
    %c0_i32 = arith.constant 0 : i32
    %c0_i32_0 = arith.constant 0 : i32
    return %arg0, %c0_i32 : i32, i32
  }
  func.func @transform_6(%arg0: i32) -> (i32, i32) {
    %c0_i32 = arith.constant 0 : i32
    %c0_i32_0 = arith.constant 0 : i32
    return %arg0, %c0_i32 : i32, i32
  }
}

</mosaic_0001>

<llo_original>
// kernel: tpu_custom_call.1
$region0: #{tpu_custom_call.1}
  #allocation0 [shape = 'u32[]', space=smem, size = 0x4, offset = 0x4, fixed_abs, tag = 'smem constant byte address 0x4 - core index']
  #allocation1 [shape = 'u32[144,128]{1,0:T(1,128)}', space=vmem, size = 0x12000, scoped, tag = 'internal scratch']
  #allocation2 [shape = 'f32[1]{0:T(128)S(6)}', space=smem, size = 0x200, scoped, tag = 'scoped memory for tpu_custom_call.1']
  %s0 = inlined_call_operand.hbm [shape: bf16[4,8,256], index: 0, kind: input, shape index: {}]
  %s1 = inlined_call_operand.hbm [shape: bf16[256,128], index: 1, kind: input, shape index: {}]
  %s2 = inlined_call_operand.vmem [shape: f32[1,128], index: 2, kind: input, shape index: {}]
  %s3 = inlined_call_operand.hbm [shape: f32[128,128], index: 3, kind: input, shape index: {}]
  %s4 = inlined_call_operand.<no memory space> [shape: f32[1], index: 4, kind: input, shape index: {}]
  %s5 = inlined_call_operand.hbm [shape: f32[8,128], index: 5, kind: output, shape index: {0}]
  %s6 = inlined_call_operand.hbm [shape: f32[8,128], index: 6, kind: output, shape index: {1}]
  %7 = xla_tuple %s5, %s6
  %s8 = sld [smem:[#allocation0]]
  $region50: #{tpu_custom_call.1} parent=0
    _
  %s10 = ssub.s32 1, %s8
  %s11 = scalar_select 0, %s10, %s8
  %12 = sst [smem:[#allocation2]] %s4
  $region1: #{tpu_custom_call.1} parent=0
    #allocation3 [shape = 'u8[16384]{0}', space=vmem, size = 0x4000, scoped, tag = 'input window, operand 0, single buffered']
    #allocation4 [shape = 's32[1]{0}', space=sflag, size = 0x4, scoped, tag = 'scoped memory for tpu_custom_call.1']
    #allocation5 [shape = 's32[1]{0}', space=sflag, size = 0x4, scoped, tag = 'scoped memory for tpu_custom_call.1']
    #allocation6 [shape = 'u8[65536]{0}', space=vmem, size = 0x10000, scoped, tag = 'input window, operand 1, single buffered']
    #allocation7 [shape = 's32[1]{0}', space=sflag, size = 0x4, scoped, tag = 'scoped memory for tpu_custom_call.1']
    #allocation8 [shape = 'u8[65536]{0}', space=vmem, size = 0x10000, scoped, tag = 'input window, operand 3, single buffered']
    #allocation9 [shape = 'u8[4096]{0}', space=vmem, size = 0x1000, scoped, tag = 'output window, operand 0, single buffered']
    #allocation10 [shape = 'u8[4096]{0}', space=vmem, size = 0x1000, scoped, tag = 'output window, operand 1, single buffered']
    #allocation11 [shape = 's32[1]{0}', space=sflag, size = 0x4, scoped, tag = 'scoped memory for tpu_custom_call.1']
    %13 = vsyncpa [#allocation4], 0
    %14 = vsyncpa [#allocation7], 0
    %15 = vsyncpa [#allocation5], 0
    %16 = vsyncpa [#allocation11], 0
    // Predicated region
    $region2: #{tpu_custom_call.1} parent=1 // pred_check
      _
    $region3: #{tpu_custom_call.1} parent=1 // pred_check_branch
      %18 = sbr.rel (0) target = $region5
    $region4: #{tpu_custom_call.1} parent=1 // pred_region
      %s20 = ssub.s32 512, 512
      %21 = vsyncadd [#allocation4], %s20
      %s22 = sshll.u32 [#allocation3], 4
      %s23 = int_to_ptr.vmem [resolvable:$true] %s22
      %28 = dma.hbm_to_vmem [thread:$0]  %s0, 512, %s23, [#allocation4], 128, 128, 8
    $region5: #{tpu_custom_call.1} parent=1 // pred_fallthru
      _
    // Predicated region
    $region6: #{tpu_custom_call.1} parent=1 // pred_check
      _
    $region7: #{tpu_custom_call.1} parent=1 // pred_check_branch
      %30 = sbr.rel (0) target = $region9
    $region8: #{tpu_custom_call.1} parent=1 // pred_region
      %s32 = ssub.s32 2048, 2048
      %33 = vsyncadd [#allocation7], %s32
      %s34 = sshll.u32 [#allocation6], 4
      %s35 = int_to_ptr.vmem [resolvable:$true] %s34
      %40 = dma.hbm_to_vmem [thread:$0]  %s1, 2048, %s35, [#allocation7], 64, 64, 4
    $region9: #{tpu_custom_call.1} parent=1 // pred_fallthru
      _
    // Predicated region
    $region10: #{tpu_custom_call.1} parent=1 // pred_check
      _
    $region11: #{tpu_custom_call.1} parent=1 // pred_check_branch
      %42 = sbr.rel (0) target = $region13
    $region12: #{tpu_custom_call.1} parent=1 // pred_region
      _
    $region13: #{tpu_custom_call.1} parent=1 // pred_fallthru
      _
    // Predicated region
    $region14: #{tpu_custom_call.1} parent=1 // pred_check
      _
    $region15: #{tpu_custom_call.1} parent=1 // pred_check_branch
      %44 = sbr.rel (0) target = $region17
    $region16: #{tpu_custom_call.1} parent=1 // pred_region
      %s46 = ssub.s32 2048, 2048
      %47 = vsyncadd [#allocation7], %s46
      %s48 = sshll.u32 [#allocation8], 4
      %s49 = int_to_ptr.vmem [resolvable:$true] %s48
      %54 = dma.hbm_to_vmem [thread:$0]  %s3, 2048, %s49, [#allocation7], 128, 128, 8
    $region17: #{tpu_custom_call.1} parent=1 // pred_fallthru
      _
    // Predicated region
    $region18: #{tpu_custom_call.1} parent=1 // pred_check
      _
    $region19: #{tpu_custom_call.1} parent=1 // pred_check_branch
      %56 = sbr.rel (0) target = $region21
    $region20: #{tpu_custom_call.1} parent=1 // pred_region
      _
    $region21: #{tpu_custom_call.1} parent=1 // pred_fallthru
      _
    // Predicated region
    $region22: #{tpu_custom_call.1} parent=1 // pred_check
      _
    $region23: #{tpu_custom_call.1} parent=1 // pred_check_branch
      %58 = sbr.rel (0) target = $region25
    $region24: #{tpu_custom_call.1} parent=1 // pred_region
      %59 = dma.done [#allocation4], 512
    $region25: #{tpu_custom_call.1} parent=1 // pred_fallthru
      _
    // Predicated region
    $region26: #{tpu_custom_call.1} parent=1 // pred_check
      _
    $region27: #{tpu_custom_call.1} parent=1 // pred_check_branch
      %61 = sbr.rel (0) target = $region29
    $region28: #{tpu_custom_call.1} parent=1 // pred_region
      %62 = dma.done [#allocation7], 2048
    $region29: #{tpu_custom_call.1} parent=1 // pred_fallthru
      _
    // Predicated region
    $region30: #{tpu_custom_call.1} parent=1 // pred_check
      _
    $region31: #{tpu_custom_call.1} parent=1 // pred_check_branch
      %64 = sbr.rel (0) target = $region33
    $region32: #{tpu_custom_call.1} parent=1 // pred_region
      %65 = dma.done [#allocation7], 2048
    $region33: #{tpu_custom_call.1} parent=1 // pred_fallthru
      _
    %v67 = vld [vmem:[#allocation3] sm:$0xff]
    %v68 = vld [vmem:[#allocation3 + $0x8] sm:$0xff]
    %v69 = vld [vmem:[#allocation3 + $0x10] sm:$0xff]
    %v70 = vld [vmem:[#allocation3 + $0x18] sm:$0xff]
    %v71 = vunpack.c.l.bf16 %v67
    %v72 = vunpack.c.h.bf16 %v67
    %v73 = vunpack.c.l.bf16 %v68
    %v74 = vunpack.c.h.bf16 %v68
    %v75 = vunpack.c.l.bf16 %v69
    %v76 = vunpack.c.h.bf16 %v69
    %v77 = vunpack.c.l.bf16 %v70
    %v78 = vunpack.c.h.bf16 %v70
    %v79 = vadd.f32 %v71, %v73
    %v80 = vadd.f32 %v79, %v75
    %v81 = vadd.f32 %v80, %v77
    %v82 = vadd.f32 %v72, %v74
    %v83 = vadd.f32 %v82, %v76
    %v84 = vadd.f32 %v83, %v78
    %v85 = vmul.f32 %v81, 0.25
    %v86 = vmul.f32 %v84, 0.25
    %v87 = vpack.c.bf16 %v85, %v85
    %v88 = vpack.c.bf16 %v86, %v86
    %v89 = vld [vmem:[#allocation6] sm:$0xf]
    %v90 = vld [vmem:[#allocation6 + $0x4] sm:$0xf]
    %v91 = vld [vmem:[#allocation6 + $0x8] sm:$0xf]
    %v92 = vld [vmem:[#allocation6 + $0xc] sm:$0xf]
    %v93 = vld [vmem:[#allocation6 + $0x10] sm:$0xf]
    %v94 = vld [vmem:[#allocation6 + $0x14] sm:$0xf]
    %v95 = vld [vmem:[#allocation6 + $0x18] sm:$0xf]
    %v96 = vld [vmem:[#allocation6 + $0x1c] sm:$0xf]
    %v97 = vld [vmem:[#allocation6 + $0x20] sm:$0xf]
    %v98 = vld [vmem:[#allocation6 + $0x24] sm:$0xf]
    %v99 = vld [vmem:[#allocation6 + $0x28] sm:$0xf]
    %v100 = vld [vmem:[#allocation6 + $0x2c] sm:$0xf]
    %v101 = vld [vmem:[#allocation6 + $0x30] sm:$0xf]
    %v102 = vld [vmem:[#allocation6 + $0x34] sm:$0xf]
    %v103 = vld [vmem:[#allocation6 + $0x38] sm:$0xf]
    %v104 = vld [vmem:[#allocation6 + $0x3c] sm:$0xf]
    %v105 = vld [vmem:[#allocation6 + $0x40] sm:$0xf]
    %v106 = vld [vmem:[#allocation6 + $0x44] sm:$0xf]
    %v107 = vld [vmem:[#allocation6 + $0x48] sm:$0xf]
    %v108 = vld [vmem:[#allocation6 + $0x4c] sm:$0xf]
    %v109 = vld [vmem:[#allocation6 + $0x50] sm:$0xf]
    %v110 = vld [vmem:[#allocation6 + $0x54] sm:$0xf]
    %v111 = vld [vmem:[#allocation6 + $0x58] sm:$0xf]
    %v112 = vld [vmem:[#allocation6 + $0x5c] sm:$0xf]
    %v113 = vld [vmem:[#allocation6 + $0x60] sm:$0xf]
    %v114 = vld [vmem:[#allocation6 + $0x64] sm:$0xf]
    %v115 = vld [vmem:[#allocation6 + $0x68] sm:$0xf]
    %v116 = vld [vmem:[#allocation6 + $0x6c] sm:$0xf]
    %v117 = vld [vmem:[#allocation6 + $0x70] sm:$0xf]
    %v118 = vld [vmem:[#allocation6 + $0x74] sm:$0xf]
    %v119 = vld [vmem:[#allocation6 + $0x78] sm:$0xf]
    %v120 = vld [vmem:[#allocation6 + $0x7c] sm:$0xf]
    %v121 = vld [vmem:[%s2] sm:$0x1]
    %v123 = vlaneseq
    %v124 = vshrl.u32 %v123, 7
    %v125 = vsub.s32 0, %v124
    %v126 = vrot.slane %v121, %v125
    %v160 = vunpack.c.l.b16 %v89
    %v161 = vunpack.c.l.b16 %v90
    %v162 = vunpack.c.l.b16 %v91
    %v163 = vunpack.c.l.b16 %v92
    %v164 = vunpack.c.l.b16 %v93
    %v165 = vunpack.c.l.b16 %v94
    %v166 = vunpack.c.l.b16 %v95
    %v167 = vunpack.c.l.b16 %v96
    %v168 = vunpack.c.l.b16 %v97
    %v169 = vunpack.c.l.b16 %v98
    %v170 = vunpack.c.l.b16 %v99
    %v171 = vunpack.c.l.b16 %v100
    %v172 = vunpack.c.l.b16 %v101
    %v173 = vunpack.c.l.b16 %v102
    %v174 = vunpack.c.l.b16 %v103
    %v175 = vunpack.c.l.b16 %v104
    %v176 = vunpack.c.l.b16 %v105
    %v177 = vunpack.c.l.b16 %v106
    %v178 = vunpack.c.l.b16 %v107
    %v179 = vunpack.c.l.b16 %v108
    %v180 = vunpack.c.l.b16 %v109
    %v181 = vunpack.c.l.b16 %v110
    %v182 = vunpack.c.l.b16 %v111
    %v183 = vunpack.c.l.b16 %v112
    %v184 = vunpack.c.l.b16 %v113
    %v185 = vunpack.c.l.b16 %v114
    %v186 = vunpack.c.l.b16 %v115
    %v187 = vunpack.c.l.b16 %v116
    %v188 = vunpack.c.l.b16 %v117
    %v189 = vunpack.c.l.b16 %v118
    %v190 = vunpack.c.l.b16 %v119
    %v191 = vunpack.c.l.b16 %v120
    %v192 = vpack.c.b16 %v161, %v160
    %v193 = vpack.c.b16 %v163, %v162
    %v194 = vpack.c.b16 %v165, %v164
    %v195 = vpack.c.b16 %v167, %v166
    %v196 = vpack.c.b16 %v169, %v168
    %v197 = vpack.c.b16 %v171, %v170
    %v198 = vpack.c.b16 %v173, %v172
    %v199 = vpack.c.b16 %v175, %v174
    %v200 = vpack.c.b16 %v177, %v176
    %v201 = vpack.c.b16 %v179, %v178
    %v202 = vpack.c.b16 %v181, %v180
    %v203 = vpack.c.b16 %v183, %v182
    %v204 = vpack.c.b16 %v185, %v184
    %v205 = vpack.c.b16 %v187, %v186
    %v206 = vpack.c.b16 %v189, %v188
    %v207 = vpack.c.b16 %v191, %v190
    %224 = vmatprep.subr.bf16.mxu0 0
    %225 = vmatpush1.bf16.msra.mxu0 %v192
    %226 = vmatprep.subr.bf16.mxu0 0
    %227 = vmatpush1.bf16.msra.mxu0 %v193
    %228 = vmatprep.subr.bf16.mxu0 0
    %229 = vmatpush1.bf16.msra.mxu0 %v194
    %230 = vmatprep.subr.bf16.mxu0 0
    %231 = vmatpush1.bf16.msra.mxu0 %v195
    %232 = vmatprep.subr.bf16.mxu0 0
    %233 = vmatpush1.bf16.msra.mxu0 %v196
    %234 = vmatprep.subr.bf16.mxu0 0
    %235 = vmatpush1.bf16.msra.mxu0 %v197
    %236 = vmatprep.subr.bf16.mxu0 0
    %237 = vmatpush1.bf16.msra.mxu0 %v198
    %238 = vmatprep.subr.bf16.mxu0 0
    %239 = vmatpush1.bf16.msra.mxu0 %v199
    %240 = vmatprep.subr.bf16.mxu0 0
    %241 = vmatpush1.bf16.msra.mxu0 %v200
    %242 = vmatprep.subr.bf16.mxu0 0
    %243 = vmatpush1.bf16.msra.mxu0 %v201
    %244 = vmatprep.subr.bf16.mxu0 0
    %245 = vmatpush1.bf16.msra.mxu0 %v202
    %246 = vmatprep.subr.bf16.mxu0 0
    %247 = vmatpush1.bf16.msra.mxu0 %v203
    %248 = vmatprep.subr.bf16.mxu0 0
    %249 = vmatpush1.bf16.msra.mxu0 %v204
    %250 = vmatprep.subr.bf16.mxu0 0
    %251 = vmatpush1.bf16.msra.mxu0 %v205
    %252 = vmatprep.subr.bf16.mxu0 0
    %253 = vmatpush1.bf16.msra.mxu0 %v206
    %254 = vmatprep.subr.bf16.mxu0 0
    %255 = vmatpush1.bf16.msra.mxu0 %v207
    %256 = vmatprep.mubr.bf16.mxu0 %v88
    %257 = vmatmul.mubr.bf16.gmra.mrb[0].mxu0 %v87
    %v258 = vpop.f32.mrb[0].mxu0
    %v259 = vadd.f32 %v126, %v258
    %v260 = vpop.f32.mrb[0].mxu0
    %v261 = vpop.f32.mrb[0].mxu0
    %v262 = vpop.f32.mrb[0].mxu0
    %263 = vdwg.mxu0
    %264 = vst [vmem:[#allocation9] sm:$0xff] %v259
    %v265 = vld [vmem:[#allocation8] sm:$0xff]
    %v266 = vld [vmem:[#allocation8 + $0x8] sm:$0xff]
    %v267 = vld [vmem:[#allocation8 + $0x10] sm:$0xff]
    %v268 = vld [vmem:[#allocation8 + $0x18] sm:$0xff]
    %v269 = vld [vmem:[#allocation8 + $0x20] sm:$0xff]
    %v270 = vld [vmem:[#allocation8 + $0x28] sm:$0xff]
    %v271 = vld [vmem:[#allocation8 + $0x30] sm:$0xff]
    %v272 = vld [vmem:[#allocation8 + $0x38] sm:$0xff]
    %v273 = vld [vmem:[#allocation8 + $0x40] sm:$0xff]
    %v274 = vld [vmem:[#allocation8 + $0x48] sm:$0xff]
    %v275 = vld [vmem:[#allocation8 + $0x50] sm:$0xff]
    %v276 = vld [vmem:[#allocation8 + $0x58] sm:$0xff]
    %v277 = vld [vmem:[#allocation8 + $0x60] sm:$0xff]
    %v278 = vld [vmem:[#allocation8 + $0x68] sm:$0xff]
    %v279 = vld [vmem:[#allocation8 + $0x70] sm:$0xff]
    %v280 = vld [vmem:[#allocation8 + $0x78] sm:$0xff]
    %v281 = vmul.f32 %v259, %v259
    %282 = vadd.xlane.f32.xlu0 %v281
    %v283 = vpop.xlane.xlu0 %282
    %v284 = vmax.f32 %v283, 1e-24
    %v285 = vrsqrt.pop %v284
    %v286 = vmul.f32 %v265, %v265
    %v287 = vmul.f32 %v266, %v266
    %v288 = vmul.f32 %v267, %v267
    %v289 = vmul.f32 %v268, %v268
    %v290 = vmul.f32 %v269, %v269
    %v291 = vmul.f32 %v270, %v270
    %v292 = vmul.f32 %v271, %v271
    %v293 = vmul.f32 %v272, %v272
    %v294 = vmul.f32 %v273, %v273
    %v295 = vmul.f32 %v274, %v274
    %v296 = vmul.f32 %v275, %v275
    %v297 = vmul.f32 %v276, %v276
    %v298 = vmul.f32 %v277, %v277
    %v299 = vmul.f32 %v278, %v278
    %v300 = vmul.f32 %v279, %v279
    %v301 = vmul.f32 %v280, %v280
    %302 = vadd.xlane.f32.xlu0 %v286
    %v303 = vpop.xlane.xlu0 %302
    %304 = vadd.xlane.f32.xlu0 %v287
    %v305 = vpop.xlane.xlu0 %304
    %306 = vadd.xlane.f32.xlu0 %v288
    %v307 = vpop.xlane.xlu0 %306
    %308 = vadd.xlane.f32.xlu0 %v289
    %v309 = vpop.xlane.xlu0 %308
    %310 = vadd.xlane.f32.xlu0 %v290
    %v311 = vpop.xlane.xlu0 %310
    %312 = vadd.xlane.f32.xlu0 %v291
    %v313 = vpop.xlane.xlu0 %312
    %314 = vadd.xlane.f32.xlu0 %v292
    %v315 = vpop.xlane.xlu0 %314
    %316 = vadd.xlane.f32.xlu0 %v293
    %v317 = vpop.xlane.xlu0 %316
    %318 = vadd.xlane.f32.xlu0 %v294
    %v319 = vpop.xlane.xlu0 %318
    %320 = vadd.xlane.f32.xlu0 %v295
    %v321 = vpop.xlane.xlu0 %320
    %322 = vadd.xlane.f32.xlu0 %v296
    %v323 = vpop.xlane.xlu0 %322
    %324 = vadd.xlane.f32.xlu0 %v297
    %v325 = vpop.xlane.xlu0 %324
    %326 = vadd.xlane.f32.xlu0 %v298
    %v327 = vpop.xlane.xlu0 %326
    %328 = vadd.xlane.f32.xlu0 %v299
    %v329 = vpop.xlane.xlu0 %328
    %330 = vadd.xlane.f32.xlu0 %v300
    %v331 = vpop.xlane.xlu0 %330
    %332 = vadd.xlane.f32.xlu0 %v301
    %v333 = vpop.xlane.xlu0 %332
    %v334 = vmax.f32 %v303, 1e-24
    %v335 = vmax.f32 %v305, 1e-24
    %v336 = vmax.f32 %v307, 1e-24
    %v337 = vmax.f32 %v309, 1e-24
    %v338 = vmax.f32 %v311, 1e-24
    %v339 = vmax.f32 %v313, 1e-24
    %v340 = vmax.f32 %v315, 1e-24
    %v341 = vmax.f32 %v317, 1e-24
    %v342 = vmax.f32 %v319, 1e-24
    %v343 = vmax.f32 %v321, 1e-24
    %v344 = vmax.f32 %v323, 1e-24
    %v345 = vmax.f32 %v325, 1e-24
    %v346 = vmax.f32 %v327, 1e-24
    %v347 = vmax.f32 %v329, 1e-24
    %v348 = vmax.f32 %v331, 1e-24
    %v349 = vmax.f32 %v333, 1e-24
    %v350 = vrsqrt.pop %v334
    %v351 = vrsqrt.pop %v335
    %v352 = vrsqrt.pop %v336
    %v353 = vrsqrt.pop %v337
    %v354 = vrsqrt.pop %v338
    %v355 = vrsqrt.pop %v339
    %v356 = vrsqrt.pop %v340
    %v357 = vrsqrt.pop %v341
    %v358 = vrsqrt.pop %v342
    %v359 = vrsqrt.pop %v343
    %v360 = vrsqrt.pop %v344
    %v361 = vrsqrt.pop %v345
    %v362 = vrsqrt.pop %v346
    %v363 = vrsqrt.pop %v347
    %v364 = vrsqrt.pop %v348
    %v365 = vrsqrt.pop %v349
    %s366 = sld [smem:[#allocation2]]
    %v367 = vstv %s366
    %v368 = vmul.f32 %v367, %v285
    %v369 = vmul.f32 %v259, %v368
    %v370 = vpack.c.bf16 %v369, %v369
    %v371 = vmul.f32 %v265, %v350
    %v372 = vmul.f32 %v266, %v351
    %v373 = vmul.f32 %v267, %v352
    %v374 = vmul.f32 %v268, %v353
    %v375 = vmul.f32 %v269, %v354
    %v376 = vmul.f32 %v270, %v355
    %v377 = vmul.f32 %v271, %v356
    %v378 = vmul.f32 %v272, %v357
    %v379 = vmul.f32 %v273, %v358
    %v380 = vmul.f32 %v274, %v359
    %v381 = vmul.f32 %v275, %v360
    %v382 = vmul.f32 %v276, %v361
    %v383 = vmul.f32 %v277, %v362
    %v384 = vmul.f32 %v278, %v363
    %v385 = vmul.f32 %v279, %v364
    %v386 = vmul.f32 %v280, %v365
    %v387 = vpack.c.bf16 %v372, %v371
    %v388 = vpack.c.bf16 %v374, %v373
    %v389 = vpack.c.bf16 %v376, %v375
    %v390 = vpack.c.bf16 %v378, %v377
    %v391 = vpack.c.bf16 %v380, %v379
    %v392 = vpack.c.bf16 %v382, %v381
    %v393 = vpack.c.bf16 %v384, %v383
    %v394 = vpack.c.bf16 %v386, %v385
    %395 = vmatprep.subr.bf16.mxu0 0
    %396 = vmatpush1.bf16.xpose.msra.mxu0 %v387
    %397 = vmatprep.subr.bf16.mxu0 0
    %398 = vmatpush1.bf16.xpose.msra.mxu0 %v388
    %399 = vmatprep.subr.bf16.mxu0 0
    %400 = vmatpush1.bf16.xpose.msra.mxu0 %v389
    %401 = vmatprep.subr.bf16.mxu0 0
    %402 = vmatpush1.bf16.xpose.msra.mxu0 %v390
    %403 = vmatprep.subr.bf16.mxu0 0
    %404 = vmatpush1.bf16.xpose.msra.mxu0 %v391
    %405 = vmatprep.subr.bf16.mxu0 0
    %406 = vmatpush1.bf16.xpose.msra.mxu0 %v392
    %407 = vmatprep.subr.bf16.mxu0 0
    %408 = vmatpush1.bf16.xpose.msra.mxu0 %v393
    %409 = vmatprep.subr.bf16.mxu0 0
    %410 = vmatpush1.bf16.xpose.msra.mxu0 %v394
    %411 = vmatprep.subr.bf16.mxu0 0
    %412 = vmatpush1.bf16.xpose.msra.mxu0 0
    %413 = vmatprep.subr.bf16.mxu0 0
    %414 = vmatpush1.bf16.xpose.msra.mxu0 0
    %415 = vmatprep.subr.bf16.mxu0 0
    %416 = vmatpush1.bf16.xpose.msra.mxu0 0
    %417 = vmatprep.subr.bf16.mxu0 0
    %418 = vmatpush1.bf16.xpose.msra.mxu0 0
    %419 = vmatprep.subr.bf16.mxu0 0
    %420 = vmatpush1.bf16.xpose.msra.mxu0 0
    %421 = vmatprep.subr.bf16.mxu0 0
    %422 = vmatpush1.bf16.xpose.msra.mxu0 0
    %423 = vmatprep.subr.bf16.mxu0 0
    %424 = vmatpush1.bf16.xpose.msra.mxu0 0
    %425 = vmatprep.subr.bf16.mxu0 0
    %426 = vmatpush1.bf16.xpose.msra.mxu0 0
    %427 = vmatprep.mubr.bf16.mxu0 0
    %428 = vmatmul.mubr.bf16.gmra.mrb[0].mxu0 %v370
    %v429 = vpop.f32.mrb[0].mxu0
    %v430 = vadd.f32 0.0, %v429
    %v431 = vpop.f32.mrb[0].mxu0
    %v432 = vpop.f32.mrb[0].mxu0
    %v433 = vpop.f32.mrb[0].mxu0
    %434 = vdwg.mxu0
    %435 = vst [vmem:[#allocation10] sm:$0xff] %v430
    // Predicated region
    $region34: #{tpu_custom_call.1} parent=1 // pred_check
      _
    $region35: #{tpu_custom_call.1} parent=1 // pred_check_branch
      %437 = sbr.rel (0) target = $region37
    $region36: #{tpu_custom_call.1} parent=1 // pred_region
      %s439 = ssub.s32 128, 128
      %440 = vsyncadd [#allocation5], %s439
      %s442 = sshll.u32 [#allocation9], 4
      %s443 = int_to_ptr.vmem [resolvable:$true] %s442
      %445 = dma.vmem_to_hbm [thread:$0]  %s443, 128, %s5, [#allocation5]
    $region37: #{tpu_custom_call.1} parent=1 // pred_fallthru
      _
    // Predicated region
    $region38: #{tpu_custom_call.1} parent=1 // pred_check
      _
    $region39: #{tpu_custom_call.1} parent=1 // pred_check_branch
      %447 = sbr.rel (0) target = $region41
    $region40: #{tpu_custom_call.1} parent=1 // pred_region
      %s449 = ssub.s32 128, 128
      %450 = vsyncadd [#allocation11], %s449
      %s452 = sshll.u32 [#allocation10], 4
      %s453 = int_to_ptr.vmem [resolvable:$true] %s452
      %455 = dma.vmem_to_hbm [thread:$0]  %s453, 128, %s6, [#allocation11]
    $region41: #{tpu_custom_call.1} parent=1 // pred_fallthru
      _
    // Predicated region
    $region42: #{tpu_custom_call.1} parent=1 // pred_check
      _
    $region43: #{tpu_custom_call.1} parent=1 // pred_check_branch
      %457 = sbr.rel (0) target = $region45
    $region44: #{tpu_custom_call.1} parent=1 // pred_region
      %458 = dma.done [#allocation5], 128
    $region45: #{tpu_custom_call.1} parent=1 // pred_fallthru
      _
    // Predicated region
    $region46: #{tpu_custom_call.1} parent=1 // pred_check
      _
    $region47: #{tpu_custom_call.1} parent=1 // pred_check_branch
      %460 = sbr.rel (0) target = $region49
    $region48: #{tpu_custom_call.1} parent=1 // pred_region
      %461 = dma.done [#allocation11], 128
    $region49: #{tpu_custom_call.1} parent=1 // pred_fallthru
      _
    %462 = vsyncpa [#allocation4], 1
    %463 = vsyncpa [#allocation7], 1
    %464 = vsyncpa [#allocation5], 1
    %465 = vsyncpa [#allocation11], 1

</llo_original>
